<compile_context>
chip_gen: v6e
topology: v6e:2x2x1
jax: 0.10.0
libtpu: 0.0.40
codegen_flags: <defaults>
</compile_context>

<pallas_src>
import jax
import jax.numpy as jnp
from jax.experimental import pallas as pl
from jax.experimental.pallas import tpu as pltpu


def _round_up(x, m):
    return ((x + m - 1) // m) * m


def _round_down(x, m):
    return (x // m) * m


def _vmem_capacity_bytes():
    """Best-effort VMEM capacity query; conservative fallback (v7x per-TC)."""
    try:
        cap = getattr(pltpu.get_tpu_info(), "vmem_capacity_bytes", None)
        if cap:
            return int(cap)
    except Exception:
        pass
    return 64 * 1024 * 1024


def _critic_kernel(s_ref, w1_ref, b1_ref, w2_ref, b2_ref, w3_ref, b3_ref, o_ref):
    # s_ref : [TILE_R, PACK*S] f32   (PACK batch elems packed per 128-lane row)
    # w1_ref: [PACK*S, PACK*H] bf16  block-diag kron(I, W1^T);  b1_ref: [1, PACK*H] f32
    # w2_ref: [PACK*H, PACK*H] bf16  block-diag kron(I, W2^T);  b2_ref: [1, PACK*H] f32
    # w3_ref: [PACK*H, PACK]   f32   block-diag kron(I, W3^T);  b3_ref: [1] f32 (SMEM)
    # o_ref : [TILE_R, PACK]   f32   value of batch element (row*PACK + col)
    x = s_ref[...].astype(jnp.bfloat16)                       # in-kernel cast (VPU)
    # Layer 1: bf16 MXU inputs, f32 accumulate; bias/ReLU in f32.
    h = jnp.dot(x, w1_ref[...], preferred_element_type=jnp.float32)
    h = jnp.maximum(h + b1_ref[...], 0.0)
    # Layer 2.
    h = jnp.dot(h.astype(jnp.bfloat16), w2_ref[...],
                preferred_element_type=jnp.float32)
    h = jnp.maximum(h + b2_ref[...], 0.0)
    # Value head: small f32 matmul against the block-diagonal w3 columns.
    o_ref[...] = jnp.dot(h, w3_ref[...], preferred_element_type=jnp.float32) + b3_ref[0]


def r_critic_forward(states, params, *, max_tile_b=32768):
    """Fused R_Critic forward. `params` are in PyTorch nn.Linear layout:
    w1 [H, S], b1 [H], w2 [H, H], b2 [H], w3 [1, H], b3 [1]."""
    w1, b1, w2, b2, w3, b3 = params
    states = states.astype(jnp.float32)
    B, S = states.shape
    H = w1.shape[0]

    # Pack PACK batch elements per 128-lane row when state_dim divides 128
    # (S=16 -> PACK=8); otherwise fall back to one element per row (still correct).
    PACK = 128 // S if (S <= 128 and 128 % S == 0) else 1
    G = 8 * PACK                     # tile granularity: keeps TILE_R a multiple of 8

    # Generation-aware batch tile: size from VMEM (≈0.7 KB of VMEM per element).
    vmem_cap = _vmem_capacity_bytes()
    vmem_limit = int(min(vmem_cap // 2, 64 * 1024 * 1024))   # 32 MiB v7x, 64 MiB v5e/v6e
    per_elem = 704                                           # conservative VMEM bytes/elem
    tile_cap = max(G, _round_down((vmem_limit // 2) // per_elem, G))
    TILE_B = max(G, min(_round_up(B, G), max(G, _round_down(max_tile_b, G)), tile_cap))
    B_pad = _round_up(B, TILE_B)
    num_tiles = B_pad // TILE_B                               # even counts feed both v7x TCs
    TILE_R = TILE_B // PACK

    if B_pad != B:
        states = jnp.pad(states, ((0, B_pad - B), (0, 0)))
    # Free row-major reshape: packed row r = batch elements r*PACK .. r*PACK+PACK-1.
    states_p = states.reshape(B_pad // PACK, PACK * S)

    # Host-side (tiny, one-off) block-diagonal weight expansion; bf16 for MXU inputs.
    eye = jnp.eye(PACK, dtype=jnp.float32)
    w1_k = jnp.kron(eye, w1.T.astype(jnp.float32)).astype(jnp.bfloat16)   # [PACK*S, PACK*H]
    w2_k = jnp.kron(eye, w2.T.astype(jnp.float32)).astype(jnp.bfloat16)   # [PACK*H, PACK*H]
    w3_k = jnp.kron(eye, w3.T.astype(jnp.float32))                        # [PACK*H, PACK] f32
    b1_k = jnp.tile(b1.astype(jnp.float32), PACK).reshape(1, PACK * H)
    b2_k = jnp.tile(b2.astype(jnp.float32), PACK).reshape(1, PACK * H)
    b3_k = b3.reshape(1).astype(jnp.float32)

    resident = lambda i: (0, 0)                               # weights stay VMEM-resident

    flops = 2 * B_pad * PACK * (S * H + H * H + H)            # padded (block-diag) MXU work
    bytes_accessed = (B_pad * S * 4                           # f32 states (single pass)
                      + B_pad * 4                             # f32 values out
                      + PACK * PACK * (S * H + H * H) * 2     # bf16 block-diag weights
                      + (PACK * PACK * H + 2 * PACK * H + 1) * 4)

    out = pl.pallas_call(
        _critic_kernel,
        out_shape=jax.ShapeDtypeStruct((B_pad // PACK, PACK), jnp.float32),
        grid=(num_tiles,),
        in_specs=[
            pl.BlockSpec((TILE_R, PACK * S), lambda i: (i, 0)),   # packed states tile
            pl.BlockSpec((PACK * S, PACK * H), resident),         # W1 block-diag
            pl.BlockSpec((1, PACK * H), resident),                # b1
            pl.BlockSpec((PACK * H, PACK * H), resident),         # W2 block-diag
            pl.BlockSpec((1, PACK * H), resident),                # b2
            pl.BlockSpec((PACK * H, PACK), resident),             # W3 block-diag
            pl.BlockSpec(memory_space=pltpu.SMEM),                # b3 scalar
        ],
        out_specs=pl.BlockSpec((TILE_R, PACK), lambda i: (i, 0)),
        compiler_params=pltpu.CompilerParams(
            dimension_semantics=("parallel",),
            vmem_limit_bytes=vmem_limit,
        ),
        cost_estimate=pl.CostEstimate(
            flops=flops, transcendentals=0, bytes_accessed=bytes_accessed),
    )(states_p, w1_k, b1_k, w2_k, b2_k, w3_k, b3_k)

    return out.reshape(-1)[:B].reshape(B, 1)


def make_params(key, state_dim, hidden_size):
    """Params in PyTorch nn.Linear layout (W: [out, in], b: [out]), with the
    PyTorch-default uniform(+-1/sqrt(fan_in)) bounds."""
    def linear(k, fan_in, fan_out):
        kw, kb = jax.random.split(k)
        bound = 1.0 / (fan_in ** 0.5)
        w = jax.random.uniform(kw, (fan_out, fan_in), jnp.float32, -bound, bound)
        b = jax.random.uniform(kb, (fan_out,), jnp.float32, -bound, bound)
        return w, b

    k1, k2, k3 = jax.random.split(key, 3)
    w1, b1 = linear(k1, state_dim, hidden_size)
    w2, b2 = linear(k2, hidden_size, hidden_size)
    w3, b3 = linear(k3, hidden_size, 1)
    return (w1, b1, w2, b2, w3, b3)


def _reference_forward(states, params, *, matmul_dtype=jnp.bfloat16):
    """Pure-JAX reference (PyTorch F.linear semantics); layers 1-2 use the same
    matmul input precision as the kernel, layer 3 stays f32."""
    w1, b1, w2, b2, w3, b3 = params
    x = jnp.dot(states.astype(matmul_dtype), w1.T.astype(matmul_dtype),
                preferred_element_type=jnp.float32)
    x = jnp.maximum(x + b1[None, :], 0.0)
    x = jnp.dot(x.astype(matmul_dtype), w2.T.astype(matmul_dtype),
                preferred_element_type=jnp.float32)
    x = jnp.maximum(x + b2[None, :], 0.0)
    return jnp.dot(x, w3.T, preferred_element_type=jnp.float32) + b3[None, :]


if __name__ == "__main__":
    key = jax.random.PRNGKey(0)
    k_params, k_states, k_states2 = jax.random.split(key, 3)

    state_dim = 16
    hidden_size = 32
    params = make_params(k_params, state_dim, hidden_size)

    # Small-shape check (batch=8), single tile.
    states = jax.random.normal(k_states, (8, state_dim), jnp.float32)
    values = jax.block_until_ready(r_critic_forward(states, params))
    assert values.shape == (8, 1)
    ref_bf16 = _reference_forward(states, params, matmul_dtype=jnp.bfloat16)
    assert jnp.allclose(values, ref_bf16, atol=1e-4, rtol=1e-4)
    ref_f32 = _reference_forward(states, params, matmul_dtype=jnp.float32)
    assert jnp.allclose(values, ref_f32, atol=5e-2, rtol=5e-2)

    # Multi-tile check: forces several grid steps, batch padding, resident weights.
    states2 = jax.random.normal(k_states2, (2600, state_dim), jnp.float32)
    values2 = jax.block_until_ready(r_critic_forward(states2, params, max_tile_b=1024))
    assert values2.shape == (2600, 1)
    ref2 = _reference_forward(states2, params, matmul_dtype=jnp.bfloat16)
    assert jnp.allclose(values2, ref2, atol=1e-4, rtol=1e-4)

    print("KERNEL_OK")
</pallas_src>

<mosaic_0001>
module attributes {stable_mosaic.version = 11 : i64} {
  func.func @_critic_kernel(%arg0: i32, %arg1: memref<8x128xf32, #tpu.memory_space<vmem>>, %arg2: memref<128x256xbf16, #tpu.memory_space<vmem>>, %arg3: memref<1x256xf32, #tpu.memory_space<vmem>>, %arg4: memref<256x256xbf16, #tpu.memory_space<vmem>>, %arg5: memref<1x256xf32, #tpu.memory_space<vmem>>, %arg6: memref<256x8xf32, #tpu.memory_space<vmem>>, %arg7: memref<1xf32, #tpu.memory_space<smem>>, %arg8: memref<8x8xf32, #tpu.memory_space<vmem>>) attributes {dimension_semantics = [#tpu.dimension_semantics<parallel>], iteration_bounds = array<i64: 1>, scalar_prefetch = 0 : i64, scratch_operands = 0 : i64, tpu.core_type = #tpu.core_type<tc>, window_params = [{transform_indices = @transform_0, window_bounds = array<i64: 8, 128>}, {pipeline_mode = #tpu.pipeline_mode<synchronous>, transform_indices = @transform_1, window_bounds = array<i64: 128, 256>}, {pipeline_mode = #tpu.pipeline_mode<synchronous>, transform_indices = @transform_2, window_bounds = array<i64: 1, 256>}, {pipeline_mode = #tpu.pipeline_mode<synchronous>, transform_indices = @transform_3, window_bounds = array<i64: 256, 256>}, {pipeline_mode = #tpu.pipeline_mode<synchronous>, transform_indices = @transform_4, window_bounds = array<i64: 1, 256>}, {pipeline_mode = #tpu.pipeline_mode<synchronous>, transform_indices = @transform_5, window_bounds = array<i64: 256, 8>}, {transform_indices = @transform_6, window_bounds = array<i64: 1>}, {transform_indices = @transform_7, window_bounds = array<i64: 8, 8>}]} {
    %c0 = arith.constant 0 : index
    %c0_0 = arith.constant 0 : index
    %0 = vector.load %arg1[%c0, %c0_0] : memref<8x128xf32, #tpu.memory_space<vmem>>, vector<8x128xf32>
    %1 = arith.truncf %0 : vector<8x128xf32> to vector<8x128xbf16>
    %c0_1 = arith.constant 0 : index
    %c0_2 = arith.constant 0 : index
    %2 = vector.load %arg2[%c0_1, %c0_2] : memref<128x256xbf16, #tpu.memory_space<vmem>>, vector<128x256xbf16>
    %cst = arith.constant dense<0.000000e+00> : vector<8x256xf32>
    %3 = tpu.matmul %1, %2, %cst {dimension_numbers = #tpu.dot_dimension_numbers<[1], [0], [0], [1], [0, 0, 1, 1], [], []>} : vector<8x128xbf16>, vector<128x256xbf16>, vector<8x256xf32> -> vector<8x256xf32>
    %c0_3 = arith.constant 0 : index
    %c0_4 = arith.constant 0 : index
    %4 = vector.load %arg3[%c0_3, %c0_4] : memref<1x256xf32, #tpu.memory_space<vmem>>, vector<1x256xf32>
    %5 = vector.broadcast %4 : vector<1x256xf32> to vector<8x256xf32>
    %6 = arith.addf %3, %5 : vector<8x256xf32>
    %cst_5 = arith.constant 0.000000e+00 : f32
    %7 = vector.broadcast %cst_5 : f32 to vector<8x256xf32>
    %8 = arith.maximumf %6, %7 : vector<8x256xf32>
    %9 = arith.truncf %8 : vector<8x256xf32> to vector<8x256xbf16>
    %c0_6 = arith.constant 0 : index
    %c0_7 = arith.constant 0 : index
    %10 = vector.load %arg4[%c0_6, %c0_7] : memref<256x256xbf16, #tpu.memory_space<vmem>>, vector<256x256xbf16>
    %cst_8 = arith.constant dense<0.000000e+00> : vector<8x256xf32>
    %11 = tpu.matmul %9, %10, %cst_8 {dimension_numbers = #tpu.dot_dimension_numbers<[1], [0], [0], [1], [0, 0, 1, 1], [], []>} : vector<8x256xbf16>, vector<256x256xbf16>, vector<8x256xf32> -> vector<8x256xf32>
    %c0_9 = arith.constant 0 : index
    %c0_10 = arith.constant 0 : index
    %12 = vector.load %arg5[%c0_9, %c0_10] : memref<1x256xf32, #tpu.memory_space<vmem>>, vector<1x256xf32>
    %13 = vector.broadcast %12 : vector<1x256xf32> to vector<8x256xf32>
    %14 = arith.addf %11, %13 : vector<8x256xf32>
    %cst_11 = arith.constant 0.000000e+00 : f32
    %15 = vector.broadcast %cst_11 : f32 to vector<8x256xf32>
    %16 = arith.maximumf %14, %15 : vector<8x256xf32>
    %c0_12 = arith.constant 0 : index
    %c0_13 = arith.constant 0 : index
    %17 = vector.load %arg6[%c0_12, %c0_13] : memref<256x8xf32, #tpu.memory_space<vmem>>, vector<256x8xf32>
    %cst_14 = arith.constant dense<0.000000e+00> : vector<8x8xf32>
    %18 = tpu.matmul %16, %17, %cst_14 {dimension_numbers = #tpu.dot_dimension_numbers<[1], [0], [0], [1], [0, 0, 1, 1], [], []>} : vector<8x256xf32>, vector<256x8xf32>, vector<8x8xf32> -> vector<8x8xf32>
    %c0_15 = arith.constant 0 : index
    %19 = memref.load %arg7[%c0_15] : memref<1xf32, #tpu.memory_space<smem>>
    %20 = vector.broadcast %19 : f32 to vector<8x8xf32>
    %21 = arith.addf %18, %20 : vector<8x8xf32>
    %c0_16 = arith.constant 0 : index
    %c0_17 = arith.constant 0 : index
    %22 = vector.load %arg8[%c0_16, %c0_17] : memref<8x8xf32, #tpu.memory_space<vmem>>, vector<8x8xf32>
    tpu.vector_store %arg8[%c0_16, %c0_17], %21 {strides = array<i32>} : memref<8x8xf32, #tpu.memory_space<vmem>>, vector<8x8xf32>,
    return
  }
  func.func @transform_0(%arg0: i32) -> (i32, i32) {
    %c0_i32 = arith.constant 0 : i32
    %c0_i32_0 = arith.constant 0 : i32
    return %arg0, %c0_i32 : i32, i32
  }
  func.func @transform_1(%arg0: i32) -> (i32, i32) {
    %c0_i32 = arith.constant 0 : i32
    %c0_i32_0 = arith.constant 0 : i32
    %c0_i32_1 = arith.constant 0 : i32
    return %c0_i32, %c0_i32_0 : i32, i32
  }
  func.func @transform_2(%arg0: i32) -> (i32, i32) {
    %c0_i32 = arith.constant 0 : i32
    %c0_i32_0 = arith.constant 0 : i32
    %c0_i32_1 = arith.constant 0 : i32
    return %c0_i32, %c0_i32_0 : i32, i32
  }
  func.func @transform_3(%arg0: i32) -> (i32, i32) {
    %c0_i32 = arith.constant 0 : i32
    %c0_i32_0 = arith.constant 0 : i32
    %c0_i32_1 = arith.constant 0 : i32
    return %c0_i32, %c0_i32_0 : i32, i32
  }
  func.func @transform_4(%arg0: i32) -> (i32, i32) {
    %c0_i32 = arith.constant 0 : i32
    %c0_i32_0 = arith.constant 0 : i32
    %c0_i32_1 = arith.constant 0 : i32
    return %c0_i32, %c0_i32_0 : i32, i32
  }
  func.func @transform_5(%arg0: i32) -> (i32, i32) {
    %c0_i32 = arith.constant 0 : i32
    %c0_i32_0 = arith.constant 0 : i32
    %c0_i32_1 = arith.constant 0 : i32
    return %c0_i32, %c0_i32_0 : i32, i32
  }
  func.func @transform_6(%arg0: i32) -> i32 {
    %c0_i32 = arith.constant 0 : i32
    %c0_i32_0 = arith.constant 0 : i32
    return %c0_i32 : i32
  }
  func.func @transform_7(%arg0: i32) -> (i32, i32) {
    %c0_i32 = arith.constant 0 : i32
    %c0_i32_0 = arith.constant 0 : i32
    return %arg0, %c0_i32 : i32, i32
  }
}

</mosaic_0001>

<llo_original>
// kernel: tpu_custom_call.1
$region0: #{tpu_custom_call.1}
  #allocation0 [shape = 'u32[]', space=smem, size = 0x4, offset = 0x4, fixed_abs, tag = 'smem constant byte address 0x4 - core index']
  #allocation1 [shape = 'u32[144,128]{1,0:T(1,128)}', space=vmem, size = 0x12000, scoped, tag = 'internal scratch']
  #allocation2 [shape = 'f32[1]{0:T(128)S(6)}', space=smem, size = 0x200, scoped, tag = 'scoped memory for tpu_custom_call.1']
  %s0 = inlined_call_operand.vmem [shape: f32[8,128], index: 0, kind: input, shape index: {}]
  %s1 = inlined_call_operand.hbm [shape: bf16[128,256], index: 1, kind: input, shape index: {}]
  %s2 = inlined_call_operand.vmem [shape: f32[1,256], index: 2, kind: input, shape index: {}]
  %s3 = inlined_call_operand.vmem [shape: bf16[256,256], index: 3, kind: input, shape index: {}]
  %s4 = inlined_call_operand.vmem [shape: f32[1,256], index: 4, kind: input, shape index: {}]
  %s5 = inlined_call_operand.vmem [shape: f32[256,8], index: 5, kind: input, shape index: {}]
  %s6 = inlined_call_operand.<no memory space> [shape: f32[1], index: 6, kind: input, shape index: {}]
  %s7 = inlined_call_operand.hbm [shape: f32[8,8], index: 7, kind: output, shape index: {}]
  %s8 = sld [smem:[#allocation0]]
  $region42: #{tpu_custom_call.1} parent=0
    _
  %s10 = ssub.s32 1, %s8
  %s11 = scalar_select 0, %s10, %s8
  %12 = sst [smem:[#allocation2]] %s6
  $region1: #{tpu_custom_call.1} parent=0
    #allocation3 [shape = 'u8[65536]{0}', space=vmem, size = 0x10000, scoped, tag = 'input window, operand 1, single buffered']
    #allocation4 [shape = 's32[1]{0}', space=sflag, size = 0x4, scoped, tag = 'scoped memory for tpu_custom_call.1']
    #allocation5 [shape = 's32[1]{0}', space=sflag, size = 0x4, scoped, tag = 'scoped memory for tpu_custom_call.1']
    #allocation6 [shape = 'u8[4096]{0}', space=vmem, size = 0x1000, scoped, tag = 'output window, operand 0, single buffered']
    %13 = vsyncpa [#allocation4], 0
    %14 = vsyncpa [#allocation5], 0
    // Predicated region
    $region2: #{tpu_custom_call.1} parent=1 // pred_check
      _
    $region3: #{tpu_custom_call.1} parent=1 // pred_check_branch
      %16 = sbr.rel (0) target = $region5
    $region4: #{tpu_custom_call.1} parent=1 // pred_region
      _
    $region5: #{tpu_custom_call.1} parent=1 // pred_fallthru
      _
    // Predicated region
    $region6: #{tpu_custom_call.1} parent=1 // pred_check
      _
    $region7: #{tpu_custom_call.1} parent=1 // pred_check_branch
      %18 = sbr.rel (0) target = $region9
    $region8: #{tpu_custom_call.1} parent=1 // pred_region
      %s20 = ssub.s32 2048, 2048
      %21 = vsyncadd [#allocation4], %s20
      %s22 = sshll.u32 [#allocation3], 4
      %s23 = int_to_ptr.vmem [resolvable:$true] %s22
      %28 = dma.hbm_to_vmem [thread:$0]  %s1, 2048, %s23, [#allocation4], 128, 128, 8
    $region9: #{tpu_custom_call.1} parent=1 // pred_fallthru
      _
    // Predicated region
    $region10: #{tpu_custom_call.1} parent=1 // pred_check
      _
    $region11: #{tpu_custom_call.1} parent=1 // pred_check_branch
      %30 = sbr.rel (0) target = $region13
    $region12: #{tpu_custom_call.1} parent=1 // pred_region
      _
    $region13: #{tpu_custom_call.1} parent=1 // pred_fallthru
      _
    // Predicated region
    $region14: #{tpu_custom_call.1} parent=1 // pred_check
      _
    $region15: #{tpu_custom_call.1} parent=1 // pred_check_branch
      %32 = sbr.rel (0) target = $region17
    $region16: #{tpu_custom_call.1} parent=1 // pred_region
      _
    $region17: #{tpu_custom_call.1} parent=1 // pred_fallthru
      _
    // Predicated region
    $region18: #{tpu_custom_call.1} parent=1 // pred_check
      _
    $region19: #{tpu_custom_call.1} parent=1 // pred_check_branch
      %34 = sbr.rel (0) target = $region21
    $region20: #{tpu_custom_call.1} parent=1 // pred_region
      _
    $region21: #{tpu_custom_call.1} parent=1 // pred_fallthru
      _
    // Predicated region
    $region22: #{tpu_custom_call.1} parent=1 // pred_check
      _
    $region23: #{tpu_custom_call.1} parent=1 // pred_check_branch
      %36 = sbr.rel (0) target = $region25
    $region24: #{tpu_custom_call.1} parent=1 // pred_region
      _
    $region25: #{tpu_custom_call.1} parent=1 // pred_fallthru
      _
    // Predicated region
    $region26: #{tpu_custom_call.1} parent=1 // pred_check
      _
    $region27: #{tpu_custom_call.1} parent=1 // pred_check_branch
      %38 = sbr.rel (0) target = $region29
    $region28: #{tpu_custom_call.1} parent=1 // pred_region
      _
    $region29: #{tpu_custom_call.1} parent=1 // pred_fallthru
      _
    // Predicated region
    $region30: #{tpu_custom_call.1} parent=1 // pred_check
      _
    $region31: #{tpu_custom_call.1} parent=1 // pred_check_branch
      %40 = sbr.rel (0) target = $region33
    $region32: #{tpu_custom_call.1} parent=1 // pred_region
      %41 = dma.done [#allocation4], 2048
    $region33: #{tpu_custom_call.1} parent=1 // pred_fallthru
      _
    %v43 = vld [vmem:[%s0] sm:$0xff]
    %v44 = vpack.c.bf16 %v43, %v43
    %v45 = vld [vmem:[#allocation3] sm:$0xff]
    %v46 = vld [vmem:[#allocation3 + $0x8] sm:$0xff]
    %v47 = vld [vmem:[#allocation3 + $0x10] sm:$0xff]
    %v48 = vld [vmem:[#allocation3 + $0x18] sm:$0xff]
    %v49 = vld [vmem:[#allocation3 + $0x20] sm:$0xff]
    %v50 = vld [vmem:[#allocation3 + $0x28] sm:$0xff]
    %v51 = vld [vmem:[#allocation3 + $0x30] sm:$0xff]
    %v52 = vld [vmem:[#allocation3 + $0x38] sm:$0xff]
    %v53 = vld [vmem:[#allocation3 + $0x40] sm:$0xff]
    %v54 = vld [vmem:[#allocation3 + $0x48] sm:$0xff]
    %v55 = vld [vmem:[#allocation3 + $0x50] sm:$0xff]
    %v56 = vld [vmem:[#allocation3 + $0x58] sm:$0xff]
    %v57 = vld [vmem:[#allocation3 + $0x60] sm:$0xff]
    %v58 = vld [vmem:[#allocation3 + $0x68] sm:$0xff]
    %v59 = vld [vmem:[#allocation3 + $0x70] sm:$0xff]
    %v60 = vld [vmem:[#allocation3 + $0x78] sm:$0xff]
    %v61 = vld [vmem:[%s2] sm:$0x3]
    %v63 = vlaneseq
    %v64 = vshrl.u32 %v63, 7
    %v65 = vsub.s32 0, %v64
    %v66 = vrot.slane %v61, %v65
    %v67 = vlaneseq
    %v68 = vshrl.u32 %v67, 7
    %v69 = vsub.s32 1, %v68
    %v70 = vrot.slane %v61, %v69
    %v89 = vunpack.c.l.b16 %v45
    %v90 = vunpack.c.h.b16 %v45
    %v91 = vunpack.c.l.b16 %v46
    %v92 = vunpack.c.h.b16 %v46
    %v93 = vunpack.c.l.b16 %v47
    %v94 = vunpack.c.h.b16 %v47
    %v95 = vunpack.c.l.b16 %v48
    %v96 = vunpack.c.h.b16 %v48
    %v97 = vunpack.c.l.b16 %v49
    %v98 = vunpack.c.h.b16 %v49
    %v99 = vunpack.c.l.b16 %v50
    %v100 = vunpack.c.h.b16 %v50
    %v101 = vunpack.c.l.b16 %v51
    %v102 = vunpack.c.h.b16 %v51
    %v103 = vunpack.c.l.b16 %v52
    %v104 = vunpack.c.h.b16 %v52
    %v105 = vunpack.c.l.b16 %v53
    %v106 = vunpack.c.h.b16 %v53
    %v107 = vunpack.c.l.b16 %v54
    %v108 = vunpack.c.h.b16 %v54
    %v109 = vunpack.c.l.b16 %v55
    %v110 = vunpack.c.h.b16 %v55
    %v111 = vunpack.c.l.b16 %v56
    %v112 = vunpack.c.h.b16 %v56
    %v113 = vunpack.c.l.b16 %v57
    %v114 = vunpack.c.h.b16 %v57
    %v115 = vunpack.c.l.b16 %v58
    %v116 = vunpack.c.h.b16 %v58
    %v117 = vunpack.c.l.b16 %v59
    %v118 = vunpack.c.h.b16 %v59
    %v119 = vunpack.c.l.b16 %v60
    %v120 = vunpack.c.h.b16 %v60
    %v121 = vpack.c.b16 %v91, %v89
    %v122 = vpack.c.b16 %v92, %v90
    %v123 = vpack.c.b16 %v95, %v93
    %v124 = vpack.c.b16 %v96, %v94
    %v125 = vpack.c.b16 %v99, %v97
    %v126 = vpack.c.b16 %v100, %v98
    %v127 = vpack.c.b16 %v103, %v101
    %v128 = vpack.c.b16 %v104, %v102
    %v129 = vpack.c.b16 %v107, %v105
    %v130 = vpack.c.b16 %v108, %v106
    %v131 = vpack.c.b16 %v111, %v109
    %v132 = vpack.c.b16 %v112, %v110
    %v133 = vpack.c.b16 %v115, %v113
    %v134 = vpack.c.b16 %v116, %v114
    %v135 = vpack.c.b16 %v119, %v117
    %v136 = vpack.c.b16 %v120, %v118
    %153 = vmatprep.subr.bf16.mxu0 %v136
    %154 = vmatpush1.bf16.msra.mxu0 %v135
    %155 = vmatprep.subr.bf16.mxu0 %v134
    %156 = vmatpush1.bf16.msra.mxu0 %v133
    %157 = vmatprep.subr.bf16.mxu0 %v132
    %158 = vmatpush1.bf16.msra.mxu0 %v131
    %159 = vmatprep.subr.bf16.mxu0 %v130
    %160 = vmatpush1.bf16.msra.mxu0 %v129
    %161 = vmatprep.subr.bf16.mxu0 %v128
    %162 = vmatpush1.bf16.msra.mxu0 %v127
    %163 = vmatprep.subr.bf16.mxu0 %v126
    %164 = vmatpush1.bf16.msra.mxu0 %v125
    %165 = vmatprep.subr.bf16.mxu0 %v124
    %166 = vmatpush1.bf16.msra.mxu0 %v123
    %167 = vmatprep.subr.bf16.mxu0 %v122
    %168 = vmatpush1.bf16.msra.mxu0 %v121
    %169 = vmatprep.subr.bf16.mxu0 0
    %170 = vmatpush2.bf16.msra.mxu0 0
    %171 = vmatprep.subr.bf16.mxu0 0
    %172 = vmatpush2.bf16.msra.mxu0 0
    %173 = vmatprep.subr.bf16.mxu0 0
    %174 = vmatpush2.bf16.msra.mxu0 0
    %175 = vmatprep.subr.bf16.mxu0 0
    %176 = vmatpush2.bf16.msra.mxu0 0
    %177 = vmatprep.subr.bf16.mxu0 0
    %178 = vmatpush2.bf16.msra.mxu0 0
    %179 = vmatprep.subr.bf16.mxu0 0
    %180 = vmatpush2.bf16.msra.mxu0 0
    %181 = vmatprep.subr.bf16.mxu0 0
    %182 = vmatpush2.bf16.msra.mxu0 0
    %183 = vmatprep.subr.bf16.mxu0 0
    %184 = vmatpush2.bf16.msra.mxu0 0
    %185 = vmatprep.mubr.bf16.mxu0 0
    %186 = vmatmul.mubr.bf16.gmra.mxu0 %v44
    %v187 = vpop.f32.mrf.mxu0
    %v188 = vadd.f32 %v66, %v187
    %v189 = vpop.f32.mrf.mxu0
    %v190 = vadd.f32 %v70, %v189
    %v191 = vpop.f32.mrf.mxu0
    %v192 = vpop.f32.mrf.mxu0
    %193 = vdwg.mxu0
    %v194 = vmax.f32 %v188, 0.0
    %v195 = vmax.f32 %v190, 0.0
    %v196 = vpack.c.bf16 %v194, %v194
    %v197 = vpack.c.bf16 %v195, %v195
    %v198 = vld [vmem:[%s3] sm:$0xff]
    %v199 = vld [vmem:[%s3 + $0x8] sm:$0xff]
    %v200 = vld [vmem:[%s3 + $0x10] sm:$0xff]
    %v201 = vld [vmem:[%s3 + $0x18] sm:$0xff]
    %v202 = vld [vmem:[%s3 + $0x20] sm:$0xff]
    %v203 = vld [vmem:[%s3 + $0x28] sm:$0xff]
    %v204 = vld [vmem:[%s3 + $0x30] sm:$0xff]
    %v205 = vld [vmem:[%s3 + $0x38] sm:$0xff]
    %v206 = vld [vmem:[%s3 + $0x40] sm:$0xff]
    %v207 = vld [vmem:[%s3 + $0x48] sm:$0xff]
    %v208 = vld [vmem:[%s3 + $0x50] sm:$0xff]
    %v209 = vld [vmem:[%s3 + $0x58] sm:$0xff]
    %v210 = vld [vmem:[%s3 + $0x60] sm:$0xff]
    %v211 = vld [vmem:[%s3 + $0x68] sm:$0xff]
    %v212 = vld [vmem:[%s3 + $0x70] sm:$0xff]
    %v213 = vld [vmem:[%s3 + $0x78] sm:$0xff]
    %v214 = vld [vmem:[%s3 + $0x80] sm:$0xff]
    %v215 = vld [vmem:[%s3 + $0x88] sm:$0xff]
    %v216 = vld [vmem:[%s3 + $0x90] sm:$0xff]
    %v217 = vld [vmem:[%s3 + $0x98] sm:$0xff]
    %v218 = vld [vmem:[%s3 + $0xa0] sm:$0xff]
    %v219 = vld [vmem:[%s3 + $0xa8] sm:$0xff]
    %v220 = vld [vmem:[%s3 + $0xb0] sm:$0xff]
    %v221 = vld [vmem:[%s3 + $0xb8] sm:$0xff]
    %v222 = vld [vmem:[%s3 + $0xc0] sm:$0xff]
    %v223 = vld [vmem:[%s3 + $0xc8] sm:$0xff]
    %v224 = vld [vmem:[%s3 + $0xd0] sm:$0xff]
    %v225 = vld [vmem:[%s3 + $0xd8] sm:$0xff]
    %v226 = vld [vmem:[%s3 + $0xe0] sm:$0xff]
    %v227 = vld [vmem:[%s3 + $0xe8] sm:$0xff]
    %v228 = vld [vmem:[%s3 + $0xf0] sm:$0xff]
    %v229 = vld [vmem:[%s3 + $0xf8] sm:$0xff]
    %v230 = vld [vmem:[%s4] sm:$0x3]
    %v232 = vlaneseq
    %v233 = vshrl.u32 %v232, 7
    %v234 = vsub.s32 0, %v233
    %v235 = vrot.slane %v230, %v234
    %v236 = vlaneseq
    %v237 = vshrl.u32 %v236, 7
    %v238 = vsub.s32 1, %v237
    %v239 = vrot.slane %v230, %v238
    %v274 = vunpack.c.l.b16 %v198
    %v275 = vunpack.c.h.b16 %v198
    %v276 = vunpack.c.l.b16 %v199
    %v277 = vunpack.c.h.b16 %v199
    %v278 = vunpack.c.l.b16 %v200
    %v279 = vunpack.c.h.b16 %v200
    %v280 = vunpack.c.l.b16 %v201
    %v281 = vunpack.c.h.b16 %v201
    %v282 = vunpack.c.l.b16 %v202
    %v283 = vunpack.c.h.b16 %v202
    %v284 = vunpack.c.l.b16 %v203
    %v285 = vunpack.c.h.b16 %v203
    %v286 = vunpack.c.l.b16 %v204
    %v287 = vunpack.c.h.b16 %v204
    %v288 = vunpack.c.l.b16 %v205
    %v289 = vunpack.c.h.b16 %v205
    %v290 = vunpack.c.l.b16 %v206
    %v291 = vunpack.c.h.b16 %v206
    %v292 = vunpack.c.l.b16 %v207
    %v293 = vunpack.c.h.b16 %v207
    %v294 = vunpack.c.l.b16 %v208
    %v295 = vunpack.c.h.b16 %v208
    %v296 = vunpack.c.l.b16 %v209
    %v297 = vunpack.c.h.b16 %v209
    %v298 = vunpack.c.l.b16 %v210
    %v299 = vunpack.c.h.b16 %v210
    %v300 = vunpack.c.l.b16 %v211
    %v301 = vunpack.c.h.b16 %v211
    %v302 = vunpack.c.l.b16 %v212
    %v303 = vunpack.c.h.b16 %v212
    %v304 = vunpack.c.l.b16 %v213
    %v305 = vunpack.c.h.b16 %v213
    %v306 = vunpack.c.l.b16 %v214
    %v307 = vunpack.c.h.b16 %v214
    %v308 = vunpack.c.l.b16 %v215
    %v309 = vunpack.c.h.b16 %v215
    %v310 = vunpack.c.l.b16 %v216
    %v311 = vunpack.c.h.b16 %v216
    %v312 = vunpack.c.l.b16 %v217
    %v313 = vunpack.c.h.b16 %v217
    %v314 = vunpack.c.l.b16 %v218
    %v315 = vunpack.c.h.b16 %v218
    %v316 = vunpack.c.l.b16 %v219
    %v317 = vunpack.c.h.b16 %v219
    %v318 = vunpack.c.l.b16 %v220
    %v319 = vunpack.c.h.b16 %v220
    %v320 = vunpack.c.l.b16 %v221
    %v321 = vunpack.c.h.b16 %v221
    %v322 = vunpack.c.l.b16 %v222
    %v323 = vunpack.c.h.b16 %v222
    %v324 = vunpack.c.l.b16 %v223
    %v325 = vunpack.c.h.b16 %v223
    %v326 = vunpack.c.l.b16 %v224
    %v327 = vunpack.c.h.b16 %v224
    %v328 = vunpack.c.l.b16 %v225
    %v329 = vunpack.c.h.b16 %v225
    %v330 = vunpack.c.l.b16 %v226
    %v331 = vunpack.c.h.b16 %v226
    %v332 = vunpack.c.l.b16 %v227
    %v333 = vunpack.c.h.b16 %v227
    %v334 = vunpack.c.l.b16 %v228
    %v335 = vunpack.c.h.b16 %v228
    %v336 = vunpack.c.l.b16 %v229
    %v337 = vunpack.c.h.b16 %v229
    %v338 = vpack.c.b16 %v276, %v274
    %v339 = vpack.c.b16 %v277, %v275
    %v340 = vpack.c.b16 %v280, %v278
    %v341 = vpack.c.b16 %v281, %v279
    %v342 = vpack.c.b16 %v284, %v282
    %v343 = vpack.c.b16 %v285, %v283
    %v344 = vpack.c.b16 %v288, %v286
    %v345 = vpack.c.b16 %v289, %v287
    %v346 = vpack.c.b16 %v292, %v290
    %v347 = vpack.c.b16 %v293, %v291
    %v348 = vpack.c.b16 %v296, %v294
    %v349 = vpack.c.b16 %v297, %v295
    %v350 = vpack.c.b16 %v300, %v298
    %v351 = vpack.c.b16 %v301, %v299
    %v352 = vpack.c.b16 %v304, %v302
    %v353 = vpack.c.b16 %v305, %v303
    %v354 = vpack.c.b16 %v308, %v306
    %v355 = vpack.c.b16 %v309, %v307
    %v356 = vpack.c.b16 %v312, %v310
    %v357 = vpack.c.b16 %v313, %v311
    %v358 = vpack.c.b16 %v316, %v314
    %v359 = vpack.c.b16 %v317, %v315
    %v360 = vpack.c.b16 %v320, %v318
    %v361 = vpack.c.b16 %v321, %v319
    %v362 = vpack.c.b16 %v324, %v322
    %v363 = vpack.c.b16 %v325, %v323
    %v364 = vpack.c.b16 %v328, %v326
    %v365 = vpack.c.b16 %v329, %v327
    %v366 = vpack.c.b16 %v332, %v330
    %v367 = vpack.c.b16 %v333, %v331
    %v368 = vpack.c.b16 %v336, %v334
    %v369 = vpack.c.b16 %v337, %v335
    %402 = vmatprep.subr.bf16.mxu0 %v353
    %403 = vmatpush1.bf16.msra.mxu0 %v352
    %404 = vmatprep.subr.bf16.mxu0 %v351
    %405 = vmatpush1.bf16.msra.mxu0 %v350
    %406 = vmatprep.subr.bf16.mxu0 %v349
    %407 = vmatpush1.bf16.msra.mxu0 %v348
    %408 = vmatprep.subr.bf16.mxu0 %v347
    %409 = vmatpush1.bf16.msra.mxu0 %v346
    %410 = vmatprep.subr.bf16.mxu0 %v345
    %411 = vmatpush1.bf16.msra.mxu0 %v344
    %412 = vmatprep.subr.bf16.mxu0 %v343
    %413 = vmatpush1.bf16.msra.mxu0 %v342
    %414 = vmatprep.subr.bf16.mxu0 %v341
    %415 = vmatpush1.bf16.msra.mxu0 %v340
    %416 = vmatprep.subr.bf16.mxu0 %v339
    %417 = vmatpush1.bf16.msra.mxu0 %v338
    %418 = vmatprep.subr.bf16.mxu0 %v369
    %419 = vmatpush2.bf16.msra.mxu0 %v368
    %420 = vmatprep.subr.bf16.mxu0 %v367
    %421 = vmatpush2.bf16.msra.mxu0 %v366
    %422 = vmatprep.subr.bf16.mxu0 %v365
    %423 = vmatpush2.bf16.msra.mxu0 %v364
    %424 = vmatprep.subr.bf16.mxu0 %v363
    %425 = vmatpush2.bf16.msra.mxu0 %v362
    %426 = vmatprep.subr.bf16.mxu0 %v361
    %427 = vmatpush2.bf16.msra.mxu0 %v360
    %428 = vmatprep.subr.bf16.mxu0 %v359
    %429 = vmatpush2.bf16.msra.mxu0 %v358
    %430 = vmatprep.subr.bf16.mxu0 %v357
    %431 = vmatpush2.bf16.msra.mxu0 %v356
    %432 = vmatprep.subr.bf16.mxu0 %v355
    %433 = vmatpush2.bf16.msra.mxu0 %v354
    %434 = vmatprep.mubr.bf16.mxu0 %v197
    %435 = vmatmul.mubr.bf16.gmra.mxu0 %v196
    %v436 = vpop.f32.mrf.mxu0
    %v437 = vadd.f32 %v235, %v436
    %v438 = vpop.f32.mrf.mxu0
    %v439 = vadd.f32 %v239, %v438
    %v440 = vpop.f32.mrf.mxu0
    %v441 = vpop.f32.mrf.mxu0
    %442 = vdwg.mxu0
    %v443 = vmax.f32 %v437, 0.0
    %v444 = vmax.f32 %v439, 0.0
    %v445 = vld [vmem:[%s5] sm:$0xff]
    %v446 = vld [vmem:[%s5 + $0x8] sm:$0xff]
    %v447 = vld [vmem:[%s5 + $0x10] sm:$0xff]
    %v448 = vld [vmem:[%s5 + $0x18] sm:$0xff]
    %v449 = vld [vmem:[%s5 + $0x20] sm:$0xff]
    %v450 = vld [vmem:[%s5 + $0x28] sm:$0xff]
    %v451 = vld [vmem:[%s5 + $0x30] sm:$0xff]
    %v452 = vld [vmem:[%s5 + $0x38] sm:$0xff]
    %v453 = vld [vmem:[%s5 + $0x40] sm:$0xff]
    %v454 = vld [vmem:[%s5 + $0x48] sm:$0xff]
    %v455 = vld [vmem:[%s5 + $0x50] sm:$0xff]
    %v456 = vld [vmem:[%s5 + $0x58] sm:$0xff]
    %v457 = vld [vmem:[%s5 + $0x60] sm:$0xff]
    %v458 = vld [vmem:[%s5 + $0x68] sm:$0xff]
    %v459 = vld [vmem:[%s5 + $0x70] sm:$0xff]
    %v460 = vld [vmem:[%s5 + $0x78] sm:$0xff]
    %v461 = vld [vmem:[%s5 + $0x80] sm:$0xff]
    %v462 = vld [vmem:[%s5 + $0x88] sm:$0xff]
    %v463 = vld [vmem:[%s5 + $0x90] sm:$0xff]
    %v464 = vld [vmem:[%s5 + $0x98] sm:$0xff]
    %v465 = vld [vmem:[%s5 + $0xa0] sm:$0xff]
    %v466 = vld [vmem:[%s5 + $0xa8] sm:$0xff]
    %v467 = vld [vmem:[%s5 + $0xb0] sm:$0xff]
    %v468 = vld [vmem:[%s5 + $0xb8] sm:$0xff]
    %v469 = vld [vmem:[%s5 + $0xc0] sm:$0xff]
    %v470 = vld [vmem:[%s5 + $0xc8] sm:$0xff]
    %v471 = vld [vmem:[%s5 + $0xd0] sm:$0xff]
    %v472 = vld [vmem:[%s5 + $0xd8] sm:$0xff]
    %v473 = vld [vmem:[%s5 + $0xe0] sm:$0xff]
    %v474 = vld [vmem:[%s5 + $0xe8] sm:$0xff]
    %v475 = vld [vmem:[%s5 + $0xf0] sm:$0xff]
    %v476 = vld [vmem:[%s5 + $0xf8] sm:$0xff]
    %s477 = sld [smem:[#allocation2]]
    %v478 = vstv %s477
    %479 = vmatprep.subr.mxu0 0.0
    %480 = vmatpush1.msra.mxu0 %v460
    %481 = vmatprep.subr.mxu0 0.0
    %482 = vmatpush1.msra.mxu0 %v459
    %483 = vmatprep.subr.mxu0 0.0
    %484 = vmatpush1.msra.mxu0 %v458
    %485 = vmatprep.subr.mxu0 0.0
    %486 = vmatpush1.msra.mxu0 %v457
    %487 = vmatprep.subr.mxu0 0.0
    %488 = vmatpush1.msra.mxu0 %v456
    %489 = vmatprep.subr.mxu0 0.0
    %490 = vmatpush1.msra.mxu0 %v455
    %491 = vmatprep.subr.mxu0 0.0
    %492 = vmatpush1.msra.mxu0 %v454
    %493 = vmatprep.subr.mxu0 0.0
    %494 = vmatpush1.msra.mxu0 %v453
    %495 = vmatprep.subr.mxu0 0.0
    %496 = vmatpush1.msra.mxu0 %v452
    %497 = vmatprep.subr.mxu0 0.0
    %498 = vmatpush1.msra.mxu0 %v451
    %499 = vmatprep.subr.mxu0 0.0
    %500 = vmatpush1.msra.mxu0 %v450
    %501 = vmatprep.subr.mxu0 0.0
    %502 = vmatpush1.msra.mxu0 %v449
    %503 = vmatprep.subr.mxu0 0.0
    %504 = vmatpush1.msra.mxu0 %v448
    %505 = vmatprep.subr.mxu0 0.0
    %506 = vmatpush1.msra.mxu0 %v447
    %507 = vmatprep.subr.mxu0 0.0
    %508 = vmatpush1.msra.mxu0 %v446
    %509 = vmatprep.subr.mxu0 0.0
    %510 = vmatpush1.msra.mxu0 %v445
    %511 = vmatprep.subr.mxu0 0.0
    %512 = vmatpush2.msra.mxu0 %v476
    %513 = vmatprep.subr.mxu0 0.0
    %514 = vmatpush2.msra.mxu0 %v475
    %515 = vmatprep.subr.mxu0 0.0
    %516 = vmatpush2.msra.mxu0 %v474
    %517 = vmatprep.subr.mxu0 0.0
    %518 = vmatpush2.msra.mxu0 %v473
    %519 = vmatprep.subr.mxu0 0.0
    %520 = vmatpush2.msra.mxu0 %v472
    %521 = vmatprep.subr.mxu0 0.0
    %522 = vmatpush2.msra.mxu0 %v471
    %523 = vmatprep.subr.mxu0 0.0
    %524 = vmatpush2.msra.mxu0 %v470
    %525 = vmatprep.subr.mxu0 0.0
    %526 = vmatpush2.msra.mxu0 %v469
    %527 = vmatprep.subr.mxu0 0.0
    %528 = vmatpush2.msra.mxu0 %v468
    %529 = vmatprep.subr.mxu0 0.0
    %530 = vmatpush2.msra.mxu0 %v467
    %531 = vmatprep.subr.mxu0 0.0
    %532 = vmatpush2.msra.mxu0 %v466
    %533 = vmatprep.subr.mxu0 0.0
    %534 = vmatpush2.msra.mxu0 %v465
    %535 = vmatprep.subr.mxu0 0.0
    %536 = vmatpush2.msra.mxu0 %v464
    %537 = vmatprep.subr.mxu0 0.0
    %538 = vmatpush2.msra.mxu0 %v463
    %539 = vmatprep.subr.mxu0 0.0
    %540 = vmatpush2.msra.mxu0 %v462
    %541 = vmatprep.subr.mxu0 0.0
    %542 = vmatpush2.msra.mxu0 %v461
    %543 = vmatprep.mubr.f32.mxu0 %v444
    %544 = vmatmul.mubr.f32.gmra.mxu0 %v443
    %v545 = vpop.f32.mrf.mxu0
    %v546 = vadd.f32 %v478, %v545
    %v547 = vpop.f32.mrf.mxu0
    %548 = vdwg.mxu0
    %vm549 = vcmask 64512
    %550 = vst.msk [vmem:[#allocation6] sm:$0xff] %vm549, %v546
    // Predicated region
    $region34: #{tpu_custom_call.1} parent=1 // pred_check
      _
    $region35: #{tpu_custom_call.1} parent=1 // pred_check_branch
      %552 = sbr.rel (0) target = $region37
    $region36: #{tpu_custom_call.1} parent=1 // pred_region
      %s554 = ssub.s32 128, 128
      %555 = vsyncadd [#allocation5], %s554
      %s557 = sshll.u32 [#allocation6], 4
      %s558 = int_to_ptr.vmem [resolvable:$true] %s557
      %560 = dma.vmem_to_hbm [thread:$0]  %s558, 128, %s7, [#allocation5]
    $region37: #{tpu_custom_call.1} parent=1 // pred_fallthru
      _
    // Predicated region
    $region38: #{tpu_custom_call.1} parent=1 // pred_check
      _
    $region39: #{tpu_custom_call.1} parent=1 // pred_check_branch
      %562 = sbr.rel (0) target = $region41
    $region40: #{tpu_custom_call.1} parent=1 // pred_region
      %563 = dma.done [#allocation5], 128
    $region41: #{tpu_custom_call.1} parent=1 // pred_fallthru
      _
    %564 = vsyncpa [#allocation4], 1
    %565 = vsyncpa [#allocation5], 1

</llo_original>
